<compile_context>
chip_gen: v7x
topology: tpu7x:2x2x1
jax: 0.10.0
libtpu: 0.0.40
codegen_flags: <defaults>
</compile_context>

<pallas_src>
import functools

import jax
import jax.numpy as jnp
import numpy as np
from jax.experimental import pallas as pl
from jax.experimental.pallas import tpu as pltpu


def _js_kernel(x_ref, y_ref, o_ref, acc_ref, *, valid_rows, steps_per_part, needs_mask):
    i = pl.program_id(1)  # reduction axis: row-tiles within this partition

    @pl.when(i == 0)
    def _():
        acc_ref[...] = jnp.zeros_like(acc_ref)

    x = x_ref[...].astype(jnp.float32)
    y = y_ref[...].astype(jnp.float32)

    def lse(v):  # numerically stable log-sum-exp over the class (lane) axis
        mx = jnp.max(v, axis=-1, keepdims=True)
        return mx + jnp.log(jnp.sum(jnp.exp(v - mx), axis=-1, keepdims=True))

    # m = 0.5*(log_softmax(x) + log_softmax(y)) without materializing lx / ly.
    m = 0.5 * (x + y) - 0.5 * (lse(x) + lse(y))

    # Folded KL: 0.5*(kl(lx,m) + kl(ly,m)) pointwise = xlogy(m,m) - m*m
    #          = m*(log(m) - m), with the xlogy convention of 0 at m == 0.
    pointwise = jnp.where(m == 0.0, 0.0, m * (jnp.log(m) - m))

    if needs_mask:  # static Python bool: only emitted when the batch was padded
        block_rows = x_ref.shape[0]
        row0 = (pl.program_id(0) * steps_per_part + i) * block_rows
        rows = row0 + jax.lax.broadcasted_iota(jnp.int32, pointwise.shape, 0)
        pointwise = jnp.where(rows < valid_rows, pointwise, 0.0)

    # Fold the tile's rows onto 8 sublane rows with plain VALU adds (no XLU in the hot
    # loop); the single cross-sublane + cross-lane reduce happens once in the epilogue.
    r = pointwise.shape[0]
    if r > 8:
        pointwise = pointwise.reshape(r // 8, 8, pointwise.shape[-1]).sum(axis=0)
    acc_ref[...] += pointwise

    @pl.when(i == pl.num_programs(1) - 1)
    def _():
        o_ref[...] = jnp.sum(acc_ref[...], keepdims=True).reshape(1, 1, 1)


def _round_up(a, b):
    return ((a + b - 1) // b) * b


def js_divergence(x, y, *, block_rows=None, cast_to_bf16=False):
    """JS 'divergence' exactly as the PyTorch module computes it. Returns a scalar.

    cast_to_bf16=True halves HBM traffic (the only real lever on HBM-bound v5e/v6e);
    the kernel upcasts to f32 before exp/log either way. Off by default so the input
    numerics match the reference bit-for-bit.
    """
    assert x.shape == y.shape and x.ndim == 2
    n, c = x.shape
    if cast_to_bf16:
        x = x.astype(jnp.bfloat16)
        y = y.astype(jnp.bfloat16)
    itemsize = jnp.dtype(x.dtype).itemsize
    sub = 8 * max(1, 4 // itemsize)  # sublane packing multiple (8 for f32, 16 for bf16)

    if block_rows is None:
        # ~2 MiB per input tile, <= 512 rows: already near HBM roofline, and small enough
        # that 2 inputs x 2 pipeline buffers + a few f32 intermediates stay far below
        # v7x's 64 MiB VMEM.
        tile_bytes = 2 * 1024 * 1024
        cap_rows = max(sub, (tile_bytes // max(1, c * itemsize)) // sub * sub)
        cap_rows = min(cap_rows, 512)
        block_rows = min(cap_rows, _round_up(n, sub))
        # If that leaves too few grid steps for the DMA pipeline / 2-TensorCore split,
        # shrink toward n/8 — but never below 64 rows (per-step overhead stays negligible).
        if n // block_rows < 8 and n >= 8 * 64:
            block_rows = max(64, (n // 8) // sub * sub)
    else:
        block_rows = max(sub, _round_up(block_rows, sub))

    n_pad = _round_up(n, block_rows)
    steps = n_pad // block_rows

    # 2-way split of the row stream: on v7x each TensorCore streams half the rows; on
    # single-TC v5e/v6e the leading axis just iterates sequentially (harmless). Only
    # enabled when each partition gets >= 4 full tiles so the split never starves the
    # double-buffered DMA pipeline.
    if steps >= 8:
        num_parts = 2
        n_pad = _round_up(n_pad, 2 * block_rows)
        steps = n_pad // block_rows
    else:
        num_parts = 1
    steps_per_part = steps // num_parts

    if n_pad != n:
        x = jnp.pad(x, ((0, n_pad - n), (0, 0)))
        y = jnp.pad(y, ((0, n_pad - n), (0, 0)))

    kernel = functools.partial(
        _js_kernel,
        valid_rows=n,
        steps_per_part=steps_per_part,
        needs_mask=(n_pad != n),
    )

    def in_map(p, i):
        return (p * steps_per_part + i, 0)

    # NOTE: if profiling on v7x shows only one TensorCore busy, flip the leading axis to
    # pltpu.CORE_PARALLEL (review item 2); plain "parallel" is the documented megacore path.
    # TODO(synk): for c < 128 (e.g. the demo's c=32) lanes are under-utilized; packing
    # several rows per 128-lane register would recover VPU/EUP throughput for small-c
    # shapes, but the kernel is HBM-bound for the shapes of interest so we keep it simple.
    partials = pl.pallas_call(
        kernel,
        out_shape=jax.ShapeDtypeStruct((num_parts, 1, 1), jnp.float32),
        grid_spec=pltpu.PrefetchScalarGridSpec(
            num_scalar_prefetch=0,
            grid=(num_parts, steps_per_part),
            in_specs=[
                pl.BlockSpec((block_rows, c), in_map),
                pl.BlockSpec((block_rows, c), in_map),
            ],
            out_specs=pl.BlockSpec((1, 1, 1), lambda p, i: (p, 0, 0)),
            scratch_shapes=[pltpu.VMEM((8, c), jnp.float32)],
        ),
        compiler_params=pltpu.CompilerParams(
            dimension_semantics=("parallel", "arbitrary"),
            vmem_limit_bytes=48 * 1024 * 1024,
        ),
    )(x, y)

    # reduction='mean' divides by the total (unpadded) element count.
    return jnp.sum(partials) / float(n * c)


def _js_reference(x, y):
    """Pure-JAX reference with identical (module-faithful) semantics, for validation."""
    lx = jax.nn.log_softmax(x.astype(jnp.float32), axis=-1)
    ly = jax.nn.log_softmax(y.astype(jnp.float32), axis=-1)
    m = 0.5 * (lx + ly)
    xlogy_m = jnp.where(m == 0.0, 0.0, m * jnp.log(m))
    kl_x_m = jnp.mean(xlogy_m - m * lx)
    kl_y_m = jnp.mean(xlogy_m - m * ly)
    return 0.5 * (kl_x_m + kl_y_m)


if __name__ == "__main__":
    key = jax.random.PRNGKey(0)
    kx, ky = jax.random.split(key)

    # Small demo shape consistent with the module: a (batch, hidden) pair of logits.
    batch, hidden = 8, 32
    x = jax.random.normal(kx, (batch, hidden), dtype=jnp.float32)
    y = jax.random.normal(ky, (batch, hidden), dtype=jnp.float32)

    out = jax.block_until_ready(js_divergence(x, y))
    ref = jax.block_until_ready(_js_reference(x, y))
    # NaN-for-NaN match is expected: m averages LOG-probs, exactly as the PyTorch module does.
    np.testing.assert_allclose(
        np.asarray(out), np.asarray(ref), rtol=1e-5, atol=1e-6, equal_nan=True
    )

    # Also exercise the multi-tile / padded / 2-partition streaming path.
    kx2, ky2 = jax.random.split(ky)
    x2 = jax.random.normal(kx2, (1000, 256), dtype=jnp.float32)
    y2 = jax.random.normal(ky2, (1000, 256), dtype=jnp.float32)
    out2 = jax.block_until_ready(js_divergence(x2, y2))
    ref2 = jax.block_until_ready(_js_reference(x2, y2))
    np.testing.assert_allclose(
        np.asarray(out2), np.asarray(ref2), rtol=1e-5, atol=1e-6, equal_nan=True
    )

    print("KERNEL_OK")
</pallas_src>

<mosaic_0001>
module attributes {stable_mosaic.version = 11 : i64} {
  func.func @_js_kernel(%arg0: i32, %arg1: i32, %arg2: memref<8x32xf32, #tpu.memory_space<vmem>>, %arg3: memref<8x32xf32, #tpu.memory_space<vmem>>, %arg4: memref<1x1x1xf32, #tpu.memory_space<vmem>>, %arg5: memref<8x32xf32, #tpu.memory_space<vmem>>) attributes {dimension_semantics = [#tpu.dimension_semantics<parallel>, #tpu.dimension_semantics<arbitrary>], iteration_bounds = array<i64: 1, 1>, scalar_prefetch = 0 : i64, scratch_operands = 1 : i64, tpu.core_type = #tpu.core_type<tc>, window_params = [{transform_indices = @transform_0, window_bounds = array<i64: 8, 32>}, {transform_indices = @transform_1, window_bounds = array<i64: 8, 32>}, {transform_indices = @transform_2, window_bounds = array<i64: 1, 1, 1>}]} {
    %c0_i32 = arith.constant 0 : i32
    %0 = arith.cmpi eq, %arg1, %c0_i32 : i32
    %1 = arith.extui %0 : i1 to i32
    %c0_i32_0 = arith.constant 0 : i32
    %2 = arith.cmpi ne, %1, %c0_i32_0 : i32
    scf.if %2 {
      %cst_17 = arith.constant 0.000000e+00 : f32
      %44 = vector.broadcast %cst_17 : f32 to vector<8x32xf32>
      %c0_18 = arith.constant 0 : index
      %c0_19 = arith.constant 0 : index
      %45 = vector.load %arg5[%c0_18, %c0_19] : memref<8x32xf32, #tpu.memory_space<vmem>>, vector<8x32xf32>
      tpu.vector_store %arg5[%c0_18, %c0_19], %44 {strides = array<i32>} : memref<8x32xf32, #tpu.memory_space<vmem>>, vector<8x32xf32>,
    } else {
    }
    %c0 = arith.constant 0 : index
    %c0_1 = arith.constant 0 : index
    %3 = vector.load %arg2[%c0, %c0_1] : memref<8x32xf32, #tpu.memory_space<vmem>>, vector<8x32xf32>
    %c0_2 = arith.constant 0 : index
    %c0_3 = arith.constant 0 : index
    %4 = vector.load %arg3[%c0_2, %c0_3] : memref<8x32xf32, #tpu.memory_space<vmem>>, vector<8x32xf32>
    %5 = arith.addf %3, %4 : vector<8x32xf32>
    %cst = arith.constant 5.000000e-01 : f32
    %6 = vector.broadcast %cst : f32 to vector<8x32xf32>
    %7 = arith.mulf %6, %5 : vector<8x32xf32>
    %cst_4 = arith.constant dense<0xFF800000> : vector<8xf32>
    %8 = vector.multi_reduction <maximumf>, %3, %cst_4 [1] : vector<8x32xf32> to vector<8xf32>
    %9 = vector.shape_cast %8 : vector<8xf32> to vector<8x1xf32>
    %10 = vector.broadcast %9 : vector<8x1xf32> to vector<8x32xf32>
    %11 = arith.subf %3, %10 : vector<8x32xf32>
    %12 = math.exp %11 : vector<8x32xf32>
    %cst_5 = arith.constant dense<0.000000e+00> : vector<8xf32>
    %13 = vector.multi_reduction <add>, %12, %cst_5 [1] : vector<8x32xf32> to vector<8xf32>
    %14 = vector.shape_cast %13 : vector<8xf32> to vector<8x1xf32>
    %15 = math.log %14 : vector<8x1xf32>
    %16 = arith.addf %9, %15 : vector<8x1xf32>
    %cst_6 = arith.constant dense<0xFF800000> : vector<8xf32>
    %17 = vector.multi_reduction <maximumf>, %4, %cst_6 [1] : vector<8x32xf32> to vector<8xf32>
    %18 = vector.shape_cast %17 : vector<8xf32> to vector<8x1xf32>
    %19 = vector.broadcast %18 : vector<8x1xf32> to vector<8x32xf32>
    %20 = arith.subf %4, %19 : vector<8x32xf32>
    %21 = math.exp %20 : vector<8x32xf32>
    %cst_7 = arith.constant dense<0.000000e+00> : vector<8xf32>
    %22 = vector.multi_reduction <add>, %21, %cst_7 [1] : vector<8x32xf32> to vector<8xf32>
    %23 = vector.shape_cast %22 : vector<8xf32> to vector<8x1xf32>
    %24 = math.log %23 : vector<8x1xf32>
    %25 = arith.addf %18, %24 : vector<8x1xf32>
    %26 = arith.addf %16, %25 : vector<8x1xf32>
    %cst_8 = arith.constant 5.000000e-01 : f32
    %27 = vector.broadcast %cst_8 : f32 to vector<8x1xf32>
    %28 = arith.mulf %27, %26 : vector<8x1xf32>
    %29 = vector.broadcast %28 : vector<8x1xf32> to vector<8x32xf32>
    %30 = arith.subf %7, %29 : vector<8x32xf32>
    %cst_9 = arith.constant 0.000000e+00 : f32
    %31 = vector.broadcast %cst_9 : f32 to vector<8x32xf32>
    %32 = arith.cmpf oeq, %30, %31 : vector<8x32xf32>
    %33 = math.log %30 : vector<8x32xf32>
    %34 = arith.subf %33, %30 : vector<8x32xf32>
    %35 = arith.mulf %30, %34 : vector<8x32xf32>
    %cst_10 = arith.constant 0.000000e+00 : f32
    %36 = vector.broadcast %cst_10 : f32 to vector<8x32xf32>
    %37 = arith.select %32, %36, %35 : vector<8x32xi1>, vector<8x32xf32>
    %c0_11 = arith.constant 0 : index
    %c0_12 = arith.constant 0 : index
    %38 = vector.load %arg5[%c0_11, %c0_12] : memref<8x32xf32, #tpu.memory_space<vmem>>, vector<8x32xf32>
    %39 = arith.addf %38, %37 : vector<8x32xf32>
    %c0_13 = arith.constant 0 : index
    %c0_14 = arith.constant 0 : index
    %40 = vector.load %arg5[%c0_13, %c0_14] : memref<8x32xf32, #tpu.memory_space<vmem>>, vector<8x32xf32>
    tpu.vector_store %arg5[%c0_13, %c0_14], %39 {strides = array<i32>} : memref<8x32xf32, #tpu.memory_space<vmem>>, vector<8x32xf32>,
    %c0_i32_15 = arith.constant 0 : i32
    %41 = arith.cmpi eq, %arg1, %c0_i32_15 : i32
    %42 = arith.extui %41 : i1 to i32
    %c0_i32_16 = arith.constant 0 : i32
    %43 = arith.cmpi ne, %42, %c0_i32_16 : i32
    scf.if %43 {
      %c0_17 = arith.constant 0 : index
      %c0_18 = arith.constant 0 : index
      %44 = vector.load %arg5[%c0_17, %c0_18] : memref<8x32xf32, #tpu.memory_space<vmem>>, vector<8x32xf32>
      %45 = vector.shape_cast %44 : vector<8x32xf32> to vector<1x8x32xf32>
      %cst_19 = arith.constant dense<0.000000e+00> : vector<1xf32>
      %46 = vector.multi_reduction <add>, %45, %cst_19 [1, 2] : vector<1x8x32xf32> to vector<1xf32>
      %47 = vector.shape_cast %46 : vector<1xf32> to vector<1x1x1xf32>
      %48 = vector.extract %47[0, 0, 0] : f32 from vector<1x1x1xf32>
      %49 = vector.broadcast %48 : f32 to vector<1x1xf32>
      %50 = vector.shape_cast %49 : vector<1x1xf32> to vector<1x1x1xf32>
      %c0_20 = arith.constant 0 : index
      %c0_21 = arith.constant 0 : index
      %c0_22 = arith.constant 0 : index
      %51 = vector.load %arg4[%c0_20, %c0_21, %c0_22] : memref<1x1x1xf32, #tpu.memory_space<vmem>>, vector<1x1x1xf32>
      tpu.vector_store %arg4[%c0_20, %c0_21, %c0_22], %50 {strides = array<i32>} : memref<1x1x1xf32, #tpu.memory_space<vmem>>, vector<1x1x1xf32>,
    } else {
    }
    return
  }
  func.func @transform_0(%arg0: i32, %arg1: i32) -> (i32, i32) {
    %c1_i32 = arith.constant 1 : i32
    %0 = arith.muli %arg0, %c1_i32 : i32
    %1 = arith.addi %0, %arg1 : i32
    %c0_i32 = arith.constant 0 : i32
    %c0_i32_0 = arith.constant 0 : i32
    return %1, %c0_i32 : i32, i32
  }
  func.func @transform_1(%arg0: i32, %arg1: i32) -> (i32, i32) {
    %c1_i32 = arith.constant 1 : i32
    %0 = arith.muli %arg0, %c1_i32 : i32
    %1 = arith.addi %0, %arg1 : i32
    %c0_i32 = arith.constant 0 : i32
    %c0_i32_0 = arith.constant 0 : i32
    return %1, %c0_i32 : i32, i32
  }
  func.func @transform_2(%arg0: i32, %arg1: i32) -> (i32, i32, i32) {
    %c0_i32 = arith.constant 0 : i32
    %c0_i32_0 = arith.constant 0 : i32
    %c0_i32_1 = arith.constant 0 : i32
    return %arg0, %c0_i32, %c0_i32_0 : i32, i32, i32
  }
}

</mosaic_0001>

<llo_original>
// kernel: tpu_custom_call.1
$region0: #{tpu_custom_call.1}
  #allocation0 [shape = 'u32[]', space=smem, size = 0x4, offset = 0x4, fixed_abs, tag = 'smem constant byte address 0x4 - core index']
  #allocation1 [shape = 'u32[144,128]{1,0:T(1,128)}', space=vmem, size = 0x12000, scoped, tag = 'internal scratch']
  #allocation2 [shape = 'f32[8,32]{1,0:T(8,128)}', space=vmem, size = 0x1000, scoped, tag = 'scratch operand']
  %s0 = inlined_call_operand.hbm [shape: f32[8,32], index: 0, kind: input, shape index: {}]
  %s1 = inlined_call_operand.hbm [shape: f32[8,32], index: 1, kind: input, shape index: {}]
  %s2 = inlined_call_operand.hbm [shape: f32[1,1,1], index: 2, kind: output, shape index: {}]
  %s3 = sld [smem:[#allocation0]]
  $region34: #{tpu_custom_call.1} parent=0
    _
  %s5 = ssub.s32 1, %s3
  %s6 = scalar_select 0, %s5, %s3
  $region1: #{tpu_custom_call.1} parent=0
    #allocation3 [shape = 'u8[4096]{0}', space=vmem, size = 0x1000, scoped, tag = 'input window, operand 0, single buffered']
    #allocation4 [shape = 's32[1]{0}', space=sflag, size = 0x4, scoped, tag = 'scoped memory for tpu_custom_call.1']
    #allocation5 [shape = 's32[1]{0}', space=sflag, size = 0x4, scoped, tag = 'scoped memory for tpu_custom_call.1']
    #allocation6 [shape = 'u8[4096]{0}', space=vmem, size = 0x1000, scoped, tag = 'input window, operand 1, single buffered']
    #allocation7 [shape = 's32[1]{0}', space=sflag, size = 0x4, scoped, tag = 'scoped memory for tpu_custom_call.1']
    #allocation8 [shape = 'u8[512]{0}', space=vmem, size = 0x400, scoped, tag = 'output window, operand 0, single buffered']
    %7 = vsyncpa [#allocation4], 0
    %8 = vsyncpa [#allocation7], 0
    %9 = vsyncpa [#allocation5], 0
    // Predicated region
    $region2: #{tpu_custom_call.1} parent=1 // pred_check
      _
    $region3: #{tpu_custom_call.1} parent=1 // pred_check_branch
      %11 = sbr.rel (0) target = $region5
    $region4: #{tpu_custom_call.1} parent=1 // pred_region
      %s12 = sadd.s32 0, 0
      %s14 = ssub.s32 128, 128
      %15 = vsyncadd [#allocation4], %s14
      %s16 = smul.addr %s12, 128
      %s17 = scalar_lea.hbm %s0, %s16
      %s19 = sshll.u32 [#allocation3], 4
      %s20 = int_to_ptr.vmem [resolvable:$true] %s19
      %22 = dma.hbm_to_vmem [thread:$0]  %s17, 128, %s20, [#allocation4]
    $region5: #{tpu_custom_call.1} parent=1 // pred_fallthru
      _
    // Predicated region
    $region6: #{tpu_custom_call.1} parent=1 // pred_check
      _
    $region7: #{tpu_custom_call.1} parent=1 // pred_check_branch
      %24 = sbr.rel (0) target = $region9
    $region8: #{tpu_custom_call.1} parent=1 // pred_region
      %s25 = sadd.s32 0, 0
      %s27 = ssub.s32 128, 128
      %28 = vsyncadd [#allocation7], %s27
      %s29 = smul.addr %s25, 128
      %s30 = scalar_lea.hbm %s1, %s29
      %s32 = sshll.u32 [#allocation6], 4
      %s33 = int_to_ptr.vmem [resolvable:$true] %s32
      %35 = dma.hbm_to_vmem [thread:$0]  %s30, 128, %s33, [#allocation7]
    $region9: #{tpu_custom_call.1} parent=1 // pred_fallthru
      _
    // Predicated region
    $region10: #{tpu_custom_call.1} parent=1 // pred_check
      _
    $region11: #{tpu_custom_call.1} parent=1 // pred_check_branch
      %37 = sbr.rel (0) target = $region13
    $region12: #{tpu_custom_call.1} parent=1 // pred_region
      %38 = dma.done [#allocation4], 128
    $region13: #{tpu_custom_call.1} parent=1 // pred_fallthru
      _
    // Predicated region
    $region14: #{tpu_custom_call.1} parent=1 // pred_check
      _
    $region15: #{tpu_custom_call.1} parent=1 // pred_check_branch
      %40 = sbr.rel (0) target = $region17
    $region16: #{tpu_custom_call.1} parent=1 // pred_region
      %41 = dma.done [#allocation7], 128
    $region17: #{tpu_custom_call.1} parent=1 // pred_fallthru
      _
    %s42 = sadd.s32 0, 0
    %s43 = sadd.s32 0, 0
    %p44 = scmp.eq.s32.totalorder 0, 0
    // Predicated region
    $region18: #{tpu_custom_call.1} parent=1 // pred_check
      %p45 = pneg %p44
    $region19: #{tpu_custom_call.1} parent=1 // pred_check_branch
      %47 = sbr.rel (%p45) target = $region21
    $region20: #{tpu_custom_call.1} parent=1 // pred_region
      %vm48 = vcmask 261120
      %49 = vst.msk [vmem:[#allocation2] sm:$0xff] %vm48, 0.0
    $region21: #{tpu_custom_call.1} parent=1 // pred_fallthru
      _
    %v50 = vld [vmem:[#allocation3] sm:$0xff]
    %v51 = vld [vmem:[#allocation6] sm:$0xff]
    %v52 = vadd.f32 %v50, %v51
    %v53 = vmul.f32 %v52, 0.5
    %vm54 = vcmask 261120
    %v55 = vsel %vm54, %v50, -inf
    %56 = vmax.xlane.f32.xlu0 %v55
    %v57 = vpop.xlane.xlu0 %56
    %v58 = vsub.f32 %v50, %v57
    %v59 = vmul.f32 %v58, 1.442695
    %v60 = vpow.pop %v59
    %v61 = vsel %vm54, %v60, 0.0
    %62 = vadd.xlane.f32.xlu0 %v61
    %v63 = vpop.xlane.xlu0 %62
    %v64 = vlog2.pop %v63
    %v65 = vmul.f32 %v64, 0.6931472
    %v66 = vadd.f32 %v57, %v65
    %v67 = vsel %vm54, %v51, -inf
    %68 = vmax.xlane.f32.xlu0 %v67
    %v69 = vpop.xlane.xlu0 %68
    %v70 = vsub.f32 %v51, %v69
    %v71 = vmul.f32 %v70, 1.442695
    %v72 = vpow.pop %v71
    %v73 = vsel %vm54, %v72, 0.0
    %74 = vadd.xlane.f32.xlu0 %v73
    %v75 = vpop.xlane.xlu0 %74
    %v76 = vlog2.pop %v75
    %v77 = vmul.f32 %v76, 0.6931472
    %v78 = vadd.f32 %v69, %v77
    %v79 = vadd.f32 %v66, %v78
    %v80 = vmul.f32 %v79, 0.5
    %v81 = vsub.f32 %v53, %v80
    %vm82 = vcmp.eq.f32.partialorder %v81, 0.0
    %v83 = vlog2.pop %v81
    %v84 = vmul.f32 %v83, 0.6931472
    %v85 = vsub.f32 %v84, %v81
    %v86 = vmul.f32 %v81, %v85
    %v87 = vsel %vm82, 0.0, %v86
    %v88 = vld [vmem:[#allocation2] sm:$0xff]
    %v89 = vadd.f32 %v88, %v87
    %90 = vst.msk [vmem:[#allocation2] sm:$0xff] %vm54, %v89
    // Predicated region
    $region22: #{tpu_custom_call.1} parent=1 // pred_check
      %p91 = pneg %p44
    $region23: #{tpu_custom_call.1} parent=1 // pred_check_branch
      %93 = sbr.rel (%p91) target = $region25
    $region24: #{tpu_custom_call.1} parent=1 // pred_region
      %v94 = vld [vmem:[#allocation2] sm:$0xff]
      %v95 = vsel %vm54, %v94, 0.0
      %96 = vadd.xlane.f32.xlu0 %v95
      %v97 = vpop.xlane.xlu0 %96
      %v98 = vrot.slane %v97, 4
      %v99 = vadd.f32 %v97, %v98
      %v100 = vrot.slane %v99, 2
      %v101 = vadd.f32 %v99, %v100
      %v102 = vrot.slane %v101, 1
      %v103 = vadd.f32 %v101, %v102
      %s104 = vtos %v103
      %v105 = vstv %s104
      %vm106 = vcmask 0
      %107 = vst.msk [vmem:[#allocation8] sm:$0x1] %vm106, %v105
    $region25: #{tpu_custom_call.1} parent=1 // pred_fallthru
      _
    // Predicated region
    $region26: #{tpu_custom_call.1} parent=1 // pred_check
      _
    $region27: #{tpu_custom_call.1} parent=1 // pred_check_branch
      %109 = sbr.rel (0) target = $region29
    $region28: #{tpu_custom_call.1} parent=1 // pred_region
      %s111 = ssub.s32 16, 16
      %112 = vsyncadd [#allocation5], %s111
      %s114 = sshll.u32 [#allocation8], 4
      %s115 = int_to_ptr.vmem [resolvable:$true] %s114
      %117 = dma.vmem_to_hbm [thread:$0]  %s115, 16, %s2, [#allocation5]
    $region29: #{tpu_custom_call.1} parent=1 // pred_fallthru
      _
    // Predicated region
    $region30: #{tpu_custom_call.1} parent=1 // pred_check
      _
    $region31: #{tpu_custom_call.1} parent=1 // pred_check_branch
      %119 = sbr.rel (0) target = $region33
    $region32: #{tpu_custom_call.1} parent=1 // pred_region
      %120 = dma.done [#allocation5], 16
    $region33: #{tpu_custom_call.1} parent=1 // pred_fallthru
      _
    %121 = vsyncpa [#allocation4], 1
    %122 = vsyncpa [#allocation7], 1
    %123 = vsyncpa [#allocation5], 1

</llo_original>
